<compile_context>
chip_gen: v6e
topology: v6e:2x2x1
jax: 0.10.0
libtpu: 0.0.40
codegen_flags: <defaults>
</compile_context>

<pallas_src>
import functools

import jax
import jax.numpy as jnp
from jax.experimental import pallas as pl
from jax.experimental.pallas import tpu as pltpu

STATE_SIZE = 33
ACTION_SIZE = 4
KIN = STATE_SIZE + ACTION_SIZE          # packed [state, action] input width
HIDDEN_UNITS = (128, 128, 64, 64)
NEG_SLOPE = 0.01                        # F.leaky_relu default


def _round_up(x, m):
    return ((x + m - 1) // m) * m


def _default_bf16_epilogue():
    """bf16 bias/activation epilogue on chips with a bf16 VPU (v6e, v7x)."""
    try:
        kind = jax.devices()[0].device_kind.lower()
    except Exception:  # pragma: no cover
        return False
    if "tpu" not in kind:
        return False
    for old in ("v2", "v3", "v4", "v5"):   # no bf16 VPU/EUP on these
        if old in kind:
            return False
    return True


# --------------------------------------------------------------------------
# Kernel
# --------------------------------------------------------------------------
def ddpg_critic_kernel(
    sa_ref,                                 # (TB, 37) bf16, packed [state, action]
    w1_ref, b1_ref,                         # (37, 128) bf16 (action rows zero), bias
    w2x_ref, w2a_ref, b2_ref,               # (128,128), (37,128) (state rows zero), bias
    w3_ref, b3_ref,                         # (128, 64), bias
    w4_ref, b4_ref,                         # (64, 64), bias
    w5_ref, b5_ref,                         # (64, 1), (1, 1) f32
    out_ref,                                # (TB, 1) f32
    *, acc_dtype,
):
    """One batch tile: 4 hidden layers + linear head, everything VMEM-resident."""
    f32 = jnp.float32
    bf16 = jnp.bfloat16

    def act(h):
        # leaky_relu(x) == max(x, slope*x) for 0 <= slope <= 1 (2 VALU ops).
        return jnp.maximum(h, NEG_SLOPE * h)

    sa = sa_ref[...]                                            # (TB, 37) bf16

    # fc1: action lanes of w1 are zero, so sa @ w1_pad == state @ w1.
    h = jnp.dot(sa, w1_ref[...], preferred_element_type=f32)
    h = act(h.astype(acc_dtype) + b1_ref[...]).astype(bf16)

    # fc2 on cat([h, action]) == h @ W2x + sa @ W2a_pad (state lanes of W2a_pad are zero).
    h2 = (jnp.dot(h, w2x_ref[...], preferred_element_type=f32)
          + jnp.dot(sa, w2a_ref[...], preferred_element_type=f32))
    h = act(h2.astype(acc_dtype) + b2_ref[...]).astype(bf16)

    # fc3
    h = jnp.dot(h, w3_ref[...], preferred_element_type=f32)
    h = act(h.astype(acc_dtype) + b3_ref[...]).astype(bf16)

    # fc4
    h = jnp.dot(h, w4_ref[...], preferred_element_type=f32)
    h = act(h.astype(acc_dtype) + b4_ref[...]).astype(bf16)

    # fc5 head (no activation), f32 output.
    out_ref[...] = jnp.dot(h, w5_ref[...], preferred_element_type=f32) + b5_ref[...]


# --------------------------------------------------------------------------
# Wrapper
# --------------------------------------------------------------------------
@functools.partial(jax.jit, static_argnames=("batch_tile",))
def ddpg_critic_forward(state, action, kparams, batch_tile=512):
    """Forward pass. `kparams` must come from `prepare_kernel_params`."""
    assert batch_tile % 16 == 0, "batch_tile must be a multiple of 16"
    B = state.shape[0]
    (w1p, b1, w2x, w2ap, b2, w3, b3, w4, b4, w5, b5) = kparams
    acc_dtype = b1.dtype        # bf16 epilogue iff biases were prepared in bf16

    # ---- tiling (all static at trace time): tight padding, no forced splits.
    num_tiles = pl.cdiv(B, batch_tile)
    eff_tile = _round_up(pl.cdiv(B, num_tiles), 16)
    padded_b = num_tiles * eff_tile

    # ---- pack state+action into one lane-padded bf16 slab, zero-pad batch.
    sa = jnp.concatenate([state, action], axis=1).astype(jnp.bfloat16)
    if padded_b != B:
        sa = jnp.pad(sa, ((0, padded_b - B), (0, 0)))

    batched = lambda i: (i, 0)
    const = lambda i: (0, 0)    # constant block index: weight DMAs issued once

    in_specs = [
        pl.BlockSpec((eff_tile, KIN), batched),   # packed activations
        pl.BlockSpec(w1p.shape, const),
        pl.BlockSpec(b1.shape, const),
        pl.BlockSpec(w2x.shape, const),
        pl.BlockSpec(w2ap.shape, const),
        pl.BlockSpec(b2.shape, const),
        pl.BlockSpec(w3.shape, const),
        pl.BlockSpec(b3.shape, const),
        pl.BlockSpec(w4.shape, const),
        pl.BlockSpec(b4.shape, const),
        pl.BlockSpec(w5.shape, const),
        pl.BlockSpec(b5.shape, const),
    ]
    out_specs = pl.BlockSpec((eff_tile, 1), batched)

    q = pl.pallas_call(
        functools.partial(ddpg_critic_kernel, acc_dtype=acc_dtype),
        out_shape=jax.ShapeDtypeStruct((padded_b, 1), jnp.float32),
        grid=(num_tiles,),
        in_specs=in_specs,
        out_specs=out_specs,
        compiler_params=pltpu.CompilerParams(dimension_semantics=("parallel",)),
    )(sa, w1p, b1, w2x, w2ap, b2, w3, b3, w4, b4, w5, b5)

    return q[:B]


# --------------------------------------------------------------------------
# Parameters
# --------------------------------------------------------------------------
def init_params(key):
    """f32 parameters mirroring the PyTorch module's shapes/init.

    fc1: (state, 128), fc2: (128 + action, 128), fc3: (128, 64),
    fc4: (64, 64), fc5: (64, 1).  Hidden-layer weights ~ U(-1/sqrt(out), ...)
    (the original `hidden_init` uses weight.size()[0] == out_features on an
    nn.Linear weight of shape (out, in) — we keep that quirk); final layer
    weights ~ U(-3e-3, 3e-3); biases keep PyTorch's default
    U(-1/sqrt(in), 1/sqrt(in)).  Weights are stored transposed as (in, out).
    """
    h1, h2, h3, h4 = HIDDEN_UNITS
    dims = [
        (STATE_SIZE, h1),
        (h1 + ACTION_SIZE, h2),
        (h2, h3),
        (h3, h4),
        (h4, 1),
    ]
    keys = jax.random.split(key, 2 * len(dims))
    out = []
    for i, (din, dout) in enumerate(dims):
        wlim = 3e-3 if i == len(dims) - 1 else 1.0 / float(jnp.sqrt(jnp.float32(dout)))
        blim = 1.0 / float(jnp.sqrt(jnp.float32(din)))
        w = jax.random.uniform(keys[2 * i], (din, dout), jnp.float32, -wlim, wlim)
        b = jax.random.uniform(keys[2 * i + 1], (1, dout), jnp.float32, -blim, blim)
        out += [w, b]
    return tuple(out)   # (w1, b1, w2, b2, w3, b3, w4, b4, w5, b5)


def prepare_kernel_params(params, bf16_epilogue=None):
    """One-time conversion of f32 params into kernel-ready operands.

    Casts weights to bf16, splits fc2 into its hidden-state and action blocks,
    and zero-pads fc1 / fc2-action weights to the packed 37-lane input so the
    kernel needs no in-kernel slicing.  Biases for fc1-fc4 are cast to the
    epilogue dtype (bf16 on v6e/v7x, f32 on v5 and older); the head bias stays
    f32.  Runs outside the jitted forward, so none of this is per-call work.
    """
    if bf16_epilogue is None:
        bf16_epilogue = _default_bf16_epilogue()
    acc = jnp.bfloat16 if bf16_epilogue else jnp.float32
    bf16 = jnp.bfloat16

    (w1, b1, w2, b2, w3, b3, w4, b4, w5, b5) = params
    h1, h2 = HIDDEN_UNITS[0], HIDDEN_UNITS[1]

    # fc1 padded to the packed input: rows [0:33] = w1, rows [33:37] = 0.
    w1p = jnp.concatenate([w1, jnp.zeros((ACTION_SIZE, h1), w1.dtype)], axis=0).astype(bf16)
    # fc2 split: state-hidden block, and action block padded with zero state rows.
    w2x = w2[:h1, :].astype(bf16)
    w2ap = jnp.concatenate(
        [jnp.zeros((STATE_SIZE, h2), w2.dtype), w2[h1:, :]], axis=0
    ).astype(bf16)

    return (
        w1p, b1.astype(acc),
        w2x, w2ap, b2.astype(acc),
        w3.astype(bf16), b3.astype(acc),
        w4.astype(bf16), b4.astype(acc),
        w5.astype(bf16), b5.astype(jnp.float32),
    )


# --------------------------------------------------------------------------
# Pure-JAX references
# --------------------------------------------------------------------------
def reference_forward(state, action, params, acc_dtype=None):
    """acc_dtype=None  -> pure-f32 forward (the PyTorch module).
       acc_dtype given -> mirrors the kernel's precision exactly (bf16 matmul
       operands, f32 MXU accumulation, bias add + leaky_relu in acc_dtype)."""
    (w1, b1, w2, b2, w3, b3, w4, b4, w5, b5) = params

    def mm(x, w):
        if acc_dtype is None:
            return jnp.dot(x, w)
        return jnp.dot(x.astype(jnp.bfloat16), w.astype(jnp.bfloat16),
                       preferred_element_type=jnp.float32)

    def epilogue(h, b):
        if acc_dtype is not None:
            h = h.astype(acc_dtype)
            b = b.astype(acc_dtype)
        h = h + b
        return jnp.maximum(h, NEG_SLOPE * h)

    x = epilogue(mm(state, w1), b1)
    x = jnp.concatenate([x.astype(jnp.float32), action], axis=1)
    x = epilogue(mm(x, w2), b2)
    x = epilogue(mm(x, w3), b3)
    x = epilogue(mm(x, w4), b4)
    return mm(x, w5) + b5


# --------------------------------------------------------------------------
if __name__ == "__main__":
    key = jax.random.PRNGKey(0)
    k_param, k_data = jax.random.split(key, 2)

    params_f32 = init_params(k_param)
    kparams = prepare_kernel_params(params_f32)     # one-time prep
    acc_dtype = kparams[1].dtype                    # epilogue dtype actually used

    # batch=8   -> tiny single 16-row tile
    # batch=300 -> single 304-row tile (tight padding, batch_tile=512 default)
    # batch=300 with batch_tile=128 -> 3-tile "parallel" grid path
    cases = [(8, 512), (300, 512), (300, 128)]
    for batch, tile in cases:
        ks, ka = jax.random.split(jax.random.fold_in(k_data, batch))
        state = jax.random.normal(ks, (batch, STATE_SIZE), jnp.float32)
        action = jax.random.normal(ka, (batch, ACTION_SIZE), jnp.float32)

        q = ddpg_critic_forward(state, action, kparams, batch_tile=tile)
        q = jax.block_until_ready(q)
        assert q.shape == (batch, 1)

        # Tight check vs a reference using the kernel's exact precision recipe.
        q_ref = reference_forward(state, action, params_f32, acc_dtype=acc_dtype)
        assert jnp.allclose(q, q_ref, atol=1e-3, rtol=1e-3), "mismatch vs bf16 reference"

        # Loose check vs the pure-f32 torch-equivalent forward (bf16 rounding only).
        q_f32 = reference_forward(state, action, params_f32, acc_dtype=None)
        assert jnp.allclose(q, q_f32, atol=2e-2, rtol=2e-2), "mismatch vs f32 reference"

    print("KERNEL_OK")
</pallas_src>

<mosaic_0001>
module attributes {stable_mosaic.version = 11 : i64} {
  func.func @ddpg_critic_kernel(%arg0: i32, %arg1: memref<16x37xbf16, #tpu.memory_space<vmem>>, %arg2: memref<37x128xbf16, #tpu.memory_space<vmem>>, %arg3: memref<1x128xf32, #tpu.memory_space<vmem>>, %arg4: memref<128x128xbf16, #tpu.memory_space<vmem>>, %arg5: memref<37x128xbf16, #tpu.memory_space<vmem>>, %arg6: memref<1x128xf32, #tpu.memory_space<vmem>>, %arg7: memref<128x64xbf16, #tpu.memory_space<vmem>>, %arg8: memref<1x64xf32, #tpu.memory_space<vmem>>, %arg9: memref<64x64xbf16, #tpu.memory_space<vmem>>, %arg10: memref<1x64xf32, #tpu.memory_space<vmem>>, %arg11: memref<64x1xbf16, #tpu.memory_space<vmem>>, %arg12: memref<1x1xf32, #tpu.memory_space<vmem>>, %arg13: memref<16x1xf32, #tpu.memory_space<vmem>>) attributes {dimension_semantics = [#tpu.dimension_semantics<parallel>], iteration_bounds = array<i64: 1>, scalar_prefetch = 0 : i64, scratch_operands = 0 : i64, tpu.core_type = #tpu.core_type<tc>, window_params = [{transform_indices = @transform_0, window_bounds = array<i64: 16, 37>}, {pipeline_mode = #tpu.pipeline_mode<synchronous>, transform_indices = @transform_1, window_bounds = array<i64: 37, 128>}, {pipeline_mode = #tpu.pipeline_mode<synchronous>, transform_indices = @transform_2, window_bounds = array<i64: 1, 128>}, {pipeline_mode = #tpu.pipeline_mode<synchronous>, transform_indices = @transform_3, window_bounds = array<i64: 128, 128>}, {pipeline_mode = #tpu.pipeline_mode<synchronous>, transform_indices = @transform_4, window_bounds = array<i64: 37, 128>}, {pipeline_mode = #tpu.pipeline_mode<synchronous>, transform_indices = @transform_5, window_bounds = array<i64: 1, 128>}, {pipeline_mode = #tpu.pipeline_mode<synchronous>, transform_indices = @transform_6, window_bounds = array<i64: 128, 64>}, {pipeline_mode = #tpu.pipeline_mode<synchronous>, transform_indices = @transform_7, window_bounds = array<i64: 1, 64>}, {pipeline_mode = #tpu.pipeline_mode<synchronous>, transform_indices = @transform_8, window_bounds = array<i64: 64, 64>}, {pipeline_mode = #tpu.pipeline_mode<synchronous>, transform_indices = @transform_9, window_bounds = array<i64: 1, 64>}, {pipeline_mode = #tpu.pipeline_mode<synchronous>, transform_indices = @transform_10, window_bounds = array<i64: 64, 1>}, {pipeline_mode = #tpu.pipeline_mode<synchronous>, transform_indices = @transform_11, window_bounds = array<i64: 1, 1>}, {transform_indices = @transform_12, window_bounds = array<i64: 16, 1>}]} {
    %c0 = arith.constant 0 : index
    %c0_0 = arith.constant 0 : index
    %0 = vector.load %arg1[%c0, %c0_0] : memref<16x37xbf16, #tpu.memory_space<vmem>>, vector<16x37xbf16>
    %c0_1 = arith.constant 0 : index
    %c0_2 = arith.constant 0 : index
    %1 = vector.load %arg2[%c0_1, %c0_2] : memref<37x128xbf16, #tpu.memory_space<vmem>>, vector<37x128xbf16>
    %cst = arith.constant dense<0.000000e+00> : vector<16x128xf32>
    %2 = tpu.matmul %0, %1, %cst {dimension_numbers = #tpu.dot_dimension_numbers<[1], [0], [0], [1], [0, 0, 1, 1], [], []>} : vector<16x37xbf16>, vector<37x128xbf16>, vector<16x128xf32> -> vector<16x128xf32>
    %c0_3 = arith.constant 0 : index
    %c0_4 = arith.constant 0 : index
    %3 = vector.load %arg3[%c0_3, %c0_4] : memref<1x128xf32, #tpu.memory_space<vmem>>, vector<1x128xf32>
    %4 = vector.broadcast %3 : vector<1x128xf32> to vector<16x128xf32>
    %5 = arith.addf %2, %4 : vector<16x128xf32>
    %cst_5 = arith.constant 0.00999999977 : f32
    %6 = vector.broadcast %cst_5 : f32 to vector<16x128xf32>
    %7 = arith.mulf %6, %5 : vector<16x128xf32>
    %8 = arith.maximumf %5, %7 : vector<16x128xf32>
    %9 = arith.truncf %8 : vector<16x128xf32> to vector<16x128xbf16>
    %c0_6 = arith.constant 0 : index
    %c0_7 = arith.constant 0 : index
    %10 = vector.load %arg4[%c0_6, %c0_7] : memref<128x128xbf16, #tpu.memory_space<vmem>>, vector<128x128xbf16>
    %cst_8 = arith.constant dense<0.000000e+00> : vector<16x128xf32>
    %11 = tpu.matmul %9, %10, %cst_8 {dimension_numbers = #tpu.dot_dimension_numbers<[1], [0], [0], [1], [0, 0, 1, 1], [], []>} : vector<16x128xbf16>, vector<128x128xbf16>, vector<16x128xf32> -> vector<16x128xf32>
    %c0_9 = arith.constant 0 : index
    %c0_10 = arith.constant 0 : index
    %12 = vector.load %arg5[%c0_9, %c0_10] : memref<37x128xbf16, #tpu.memory_space<vmem>>, vector<37x128xbf16>
    %cst_11 = arith.constant dense<0.000000e+00> : vector<16x128xf32>
    %13 = tpu.matmul %0, %12, %cst_11 {dimension_numbers = #tpu.dot_dimension_numbers<[1], [0], [0], [1], [0, 0, 1, 1], [], []>} : vector<16x37xbf16>, vector<37x128xbf16>, vector<16x128xf32> -> vector<16x128xf32>
    %14 = arith.addf %11, %13 : vector<16x128xf32>
    %c0_12 = arith.constant 0 : index
    %c0_13 = arith.constant 0 : index
    %15 = vector.load %arg6[%c0_12, %c0_13] : memref<1x128xf32, #tpu.memory_space<vmem>>, vector<1x128xf32>
    %16 = vector.broadcast %15 : vector<1x128xf32> to vector<16x128xf32>
    %17 = arith.addf %14, %16 : vector<16x128xf32>
    %cst_14 = arith.constant 0.00999999977 : f32
    %18 = vector.broadcast %cst_14 : f32 to vector<16x128xf32>
    %19 = arith.mulf %18, %17 : vector<16x128xf32>
    %20 = arith.maximumf %17, %19 : vector<16x128xf32>
    %21 = arith.truncf %20 : vector<16x128xf32> to vector<16x128xbf16>
    %c0_15 = arith.constant 0 : index
    %c0_16 = arith.constant 0 : index
    %22 = vector.load %arg7[%c0_15, %c0_16] : memref<128x64xbf16, #tpu.memory_space<vmem>>, vector<128x64xbf16>
    %cst_17 = arith.constant dense<0.000000e+00> : vector<16x64xf32>
    %23 = tpu.matmul %21, %22, %cst_17 {dimension_numbers = #tpu.dot_dimension_numbers<[1], [0], [0], [1], [0, 0, 1, 1], [], []>} : vector<16x128xbf16>, vector<128x64xbf16>, vector<16x64xf32> -> vector<16x64xf32>
    %c0_18 = arith.constant 0 : index
    %c0_19 = arith.constant 0 : index
    %24 = vector.load %arg8[%c0_18, %c0_19] : memref<1x64xf32, #tpu.memory_space<vmem>>, vector<1x64xf32>
    %25 = vector.broadcast %24 : vector<1x64xf32> to vector<16x64xf32>
    %26 = arith.addf %23, %25 : vector<16x64xf32>
    %cst_20 = arith.constant 0.00999999977 : f32
    %27 = vector.broadcast %cst_20 : f32 to vector<16x64xf32>
    %28 = arith.mulf %27, %26 : vector<16x64xf32>
    %29 = arith.maximumf %26, %28 : vector<16x64xf32>
    %30 = arith.truncf %29 : vector<16x64xf32> to vector<16x64xbf16>
    %c0_21 = arith.constant 0 : index
    %c0_22 = arith.constant 0 : index
    %31 = vector.load %arg9[%c0_21, %c0_22] : memref<64x64xbf16, #tpu.memory_space<vmem>>, vector<64x64xbf16>
    %cst_23 = arith.constant dense<0.000000e+00> : vector<16x64xf32>
    %32 = tpu.matmul %30, %31, %cst_23 {dimension_numbers = #tpu.dot_dimension_numbers<[1], [0], [0], [1], [0, 0, 1, 1], [], []>} : vector<16x64xbf16>, vector<64x64xbf16>, vector<16x64xf32> -> vector<16x64xf32>
    %c0_24 = arith.constant 0 : index
    %c0_25 = arith.constant 0 : index
    %33 = vector.load %arg10[%c0_24, %c0_25] : memref<1x64xf32, #tpu.memory_space<vmem>>, vector<1x64xf32>
    %34 = vector.broadcast %33 : vector<1x64xf32> to vector<16x64xf32>
    %35 = arith.addf %32, %34 : vector<16x64xf32>
    %cst_26 = arith.constant 0.00999999977 : f32
    %36 = vector.broadcast %cst_26 : f32 to vector<16x64xf32>
    %37 = arith.mulf %36, %35 : vector<16x64xf32>
    %38 = arith.maximumf %35, %37 : vector<16x64xf32>
    %39 = arith.truncf %38 : vector<16x64xf32> to vector<16x64xbf16>
    %c0_27 = arith.constant 0 : index
    %c0_28 = arith.constant 0 : index
    %40 = vector.load %arg11[%c0_27, %c0_28] : memref<64x1xbf16, #tpu.memory_space<vmem>>, vector<64x1xbf16>
    %cst_29 = arith.constant dense<0.000000e+00> : vector<16x1xf32>
    %41 = tpu.matmul %39, %40, %cst_29 {dimension_numbers = #tpu.dot_dimension_numbers<[1], [0], [0], [1], [0, 0, 1, 1], [], []>} : vector<16x64xbf16>, vector<64x1xbf16>, vector<16x1xf32> -> vector<16x1xf32>
    %c0_30 = arith.constant 0 : index
    %c0_31 = arith.constant 0 : index
    %42 = vector.load %arg12[%c0_30, %c0_31] : memref<1x1xf32, #tpu.memory_space<vmem>>, vector<1x1xf32>
    %43 = vector.broadcast %42 : vector<1x1xf32> to vector<16x1xf32>
    %44 = arith.addf %41, %43 : vector<16x1xf32>
    %c0_32 = arith.constant 0 : index
    %c0_33 = arith.constant 0 : index
    %45 = vector.load %arg13[%c0_32, %c0_33] : memref<16x1xf32, #tpu.memory_space<vmem>>, vector<16x1xf32>
    tpu.vector_store %arg13[%c0_32, %c0_33], %44 {strides = array<i32>} : memref<16x1xf32, #tpu.memory_space<vmem>>, vector<16x1xf32>,
    return
  }
  func.func @transform_0(%arg0: i32) -> (i32, i32) {
    %c0_i32 = arith.constant 0 : i32
    %c0_i32_0 = arith.constant 0 : i32
    return %arg0, %c0_i32 : i32, i32
  }
  func.func @transform_1(%arg0: i32) -> (i32, i32) {
    %c0_i32 = arith.constant 0 : i32
    %c0_i32_0 = arith.constant 0 : i32
    %c0_i32_1 = arith.constant 0 : i32
    return %c0_i32, %c0_i32_0 : i32, i32
  }
  func.func @transform_2(%arg0: i32) -> (i32, i32) {
    %c0_i32 = arith.constant 0 : i32
    %c0_i32_0 = arith.constant 0 : i32
    %c0_i32_1 = arith.constant 0 : i32
    return %c0_i32, %c0_i32_0 : i32, i32
  }
  func.func @transform_3(%arg0: i32) -> (i32, i32) {
    %c0_i32 = arith.constant 0 : i32
    %c0_i32_0 = arith.constant 0 : i32
    %c0_i32_1 = arith.constant 0 : i32
    return %c0_i32, %c0_i32_0 : i32, i32
  }
  func.func @transform_4(%arg0: i32) -> (i32, i32) {
    %c0_i32 = arith.constant 0 : i32
    %c0_i32_0 = arith.constant 0 : i32
    %c0_i32_1 = arith.constant 0 : i32
    return %c0_i32, %c0_i32_0 : i32, i32
  }
  func.func @transform_5(%arg0: i32) -> (i32, i32) {
    %c0_i32 = arith.constant 0 : i32
    %c0_i32_0 = arith.constant 0 : i32
    %c0_i32_1 = arith.constant 0 : i32
    return %c0_i32, %c0_i32_0 : i32, i32
  }
  func.func @transform_6(%arg0: i32) -> (i32, i32) {
    %c0_i32 = arith.constant 0 : i32
    %c0_i32_0 = arith.constant 0 : i32
    %c0_i32_1 = arith.constant 0 : i32
    return %c0_i32, %c0_i32_0 : i32, i32
  }
  func.func @transform_7(%arg0: i32) -> (i32, i32) {
    %c0_i32 = arith.constant 0 : i32
    %c0_i32_0 = arith.constant 0 : i32
    %c0_i32_1 = arith.constant 0 : i32
    return %c0_i32, %c0_i32_0 : i32, i32
  }
  func.func @transform_8(%arg0: i32) -> (i32, i32) {
    %c0_i32 = arith.constant 0 : i32
    %c0_i32_0 = arith.constant 0 : i32
    %c0_i32_1 = arith.constant 0 : i32
    return %c0_i32, %c0_i32_0 : i32, i32
  }
  func.func @transform_9(%arg0: i32) -> (i32, i32) {
    %c0_i32 = arith.constant 0 : i32
    %c0_i32_0 = arith.constant 0 : i32
    %c0_i32_1 = arith.constant 0 : i32
    return %c0_i32, %c0_i32_0 : i32, i32
  }
  func.func @transform_10(%arg0: i32) -> (i32, i32) {
    %c0_i32 = arith.constant 0 : i32
    %c0_i32_0 = arith.constant 0 : i32
    %c0_i32_1 = arith.constant 0 : i32
    return %c0_i32, %c0_i32_0 : i32, i32
  }
  func.func @transform_11(%arg0: i32) -> (i32, i32) {
    %c0_i32 = arith.constant 0 : i32
    %c0_i32_0 = arith.constant 0 : i32
    %c0_i32_1 = arith.constant 0 : i32
    return %c0_i32, %c0_i32_0 : i32, i32
  }
  func.func @transform_12(%arg0: i32) -> (i32, i32) {
    %c0_i32 = arith.constant 0 : i32
    %c0_i32_0 = arith.constant 0 : i32
    return %arg0, %c0_i32 : i32, i32
  }
}

</mosaic_0001>

<llo_original>
// kernel: ddpg_critic_forward.1
$region0: #{ddpg_critic_forward.1}
  #allocation0 [shape = 'u32[]', space=smem, size = 0x4, offset = 0x4, fixed_abs, tag = 'smem constant byte address 0x4 - core index']
  #allocation1 [shape = 'u32[144,128]{1,0:T(1,128)}', space=vmem, size = 0x12000, scoped, tag = 'internal scratch']
  #allocation2 [shape = 'f32[1,1]{1,0:T(1,128)S(1)}', space=vmem, size = 0x200, scoped, tag = 'scoped memory for ddpg_critic_forward.1']
  %s0 = inlined_call_operand.vmem [shape: bf16[16,37], index: 0, kind: input, shape index: {}]
  %s1 = inlined_call_operand.vmem [shape: bf16[37,128], index: 1, kind: input, shape index: {}]
  %s2 = inlined_call_operand.vmem [shape: f32[1,128], index: 2, kind: input, shape index: {}]
  %s3 = inlined_call_operand.vmem [shape: bf16[128,128], index: 3, kind: input, shape index: {}]
  %s4 = inlined_call_operand.vmem [shape: bf16[37,128], index: 4, kind: input, shape index: {}]
  %s5 = inlined_call_operand.vmem [shape: f32[1,128], index: 5, kind: input, shape index: {}]
  %s6 = inlined_call_operand.vmem [shape: bf16[128,64], index: 6, kind: input, shape index: {}]
  %s7 = inlined_call_operand.vmem [shape: f32[1,64], index: 7, kind: input, shape index: {}]
  %s8 = inlined_call_operand.vmem [shape: bf16[64,64], index: 8, kind: input, shape index: {}]
  %s9 = inlined_call_operand.vmem [shape: f32[1,64], index: 9, kind: input, shape index: {}]
  %s10 = inlined_call_operand.vmem [shape: bf16[64,1], index: 10, kind: input, shape index: {}]
  %s11 = inlined_call_operand.<no memory space> [shape: f32[1,1], index: 11, kind: input, shape index: {}]
  %s12 = inlined_call_operand.vmem [shape: f32[16,1], index: 12, kind: output, shape index: {}]
  %s13 = sld [smem:[#allocation0]]
  $region58: #{ddpg_critic_forward.1} parent=0
    _
  %s15 = ssub.s32 1, %s13
  %s16 = scalar_select 0, %s15, %s13
  %v17 = vstv %s11
  %18 = vst [vmem:[#allocation2] sm:$0x1] %v17
  // Predicated region
  $region2: #{ddpg_critic_forward.1} parent=0 // pred_check
    _
  $region3: #{ddpg_critic_forward.1} parent=0 // pred_check_branch
    %20 = sbr.rel (0) target = $region5
  $region4: #{ddpg_critic_forward.1} parent=0 // pred_region
    _
  $region5: #{ddpg_critic_forward.1} parent=0 // pred_fallthru
    _
  // Predicated region
  $region6: #{ddpg_critic_forward.1} parent=0 // pred_check
    _
  $region7: #{ddpg_critic_forward.1} parent=0 // pred_check_branch
    %22 = sbr.rel (0) target = $region9
  $region8: #{ddpg_critic_forward.1} parent=0 // pred_region
    _
  $region9: #{ddpg_critic_forward.1} parent=0 // pred_fallthru
    _
  // Predicated region
  $region10: #{ddpg_critic_forward.1} parent=0 // pred_check
    _
  $region11: #{ddpg_critic_forward.1} parent=0 // pred_check_branch
    %24 = sbr.rel (0) target = $region13
  $region12: #{ddpg_critic_forward.1} parent=0 // pred_region
    _
  $region13: #{ddpg_critic_forward.1} parent=0 // pred_fallthru
    _
  // Predicated region
  $region14: #{ddpg_critic_forward.1} parent=0 // pred_check
    _
  $region15: #{ddpg_critic_forward.1} parent=0 // pred_check_branch
    %26 = sbr.rel (0) target = $region17
  $region16: #{ddpg_critic_forward.1} parent=0 // pred_region
    _
  $region17: #{ddpg_critic_forward.1} parent=0 // pred_fallthru
    _
  // Predicated region
  $region18: #{ddpg_critic_forward.1} parent=0 // pred_check
    _
  $region19: #{ddpg_critic_forward.1} parent=0 // pred_check_branch
    %28 = sbr.rel (0) target = $region21
  $region20: #{ddpg_critic_forward.1} parent=0 // pred_region
    _
  $region21: #{ddpg_critic_forward.1} parent=0 // pred_fallthru
    _
  // Predicated region
  $region22: #{ddpg_critic_forward.1} parent=0 // pred_check
    _
  $region23: #{ddpg_critic_forward.1} parent=0 // pred_check_branch
    %30 = sbr.rel (0) target = $region25
  $region24: #{ddpg_critic_forward.1} parent=0 // pred_region
    _
  $region25: #{ddpg_critic_forward.1} parent=0 // pred_fallthru
    _
  // Predicated region
  $region26: #{ddpg_critic_forward.1} parent=0 // pred_check
    _
  $region27: #{ddpg_critic_forward.1} parent=0 // pred_check_branch
    %32 = sbr.rel (0) target = $region29
  $region28: #{ddpg_critic_forward.1} parent=0 // pred_region
    _
  $region29: #{ddpg_critic_forward.1} parent=0 // pred_fallthru
    _
  // Predicated region
  $region30: #{ddpg_critic_forward.1} parent=0 // pred_check
    _
  $region31: #{ddpg_critic_forward.1} parent=0 // pred_check_branch
    %34 = sbr.rel (0) target = $region33
  $region32: #{ddpg_critic_forward.1} parent=0 // pred_region
    _
  $region33: #{ddpg_critic_forward.1} parent=0 // pred_fallthru
    _
  // Predicated region
  $region34: #{ddpg_critic_forward.1} parent=0 // pred_check
    _
  $region35: #{ddpg_critic_forward.1} parent=0 // pred_check_branch
    %36 = sbr.rel (0) target = $region37
  $region36: #{ddpg_critic_forward.1} parent=0 // pred_region
    _
  $region37: #{ddpg_critic_forward.1} parent=0 // pred_fallthru
    _
  // Predicated region
  $region38: #{ddpg_critic_forward.1} parent=0 // pred_check
    _
  $region39: #{ddpg_critic_forward.1} parent=0 // pred_check_branch
    %38 = sbr.rel (0) target = $region41
  $region40: #{ddpg_critic_forward.1} parent=0 // pred_region
    _
  $region41: #{ddpg_critic_forward.1} parent=0 // pred_fallthru
    _
  // Predicated region
  $region42: #{ddpg_critic_forward.1} parent=0 // pred_check
    _
  $region43: #{ddpg_critic_forward.1} parent=0 // pred_check_branch
    %40 = sbr.rel (0) target = $region45
  $region44: #{ddpg_critic_forward.1} parent=0 // pred_region
    _
  $region45: #{ddpg_critic_forward.1} parent=0 // pred_fallthru
    _
  // Predicated region
  $region46: #{ddpg_critic_forward.1} parent=0 // pred_check
    _
  $region47: #{ddpg_critic_forward.1} parent=0 // pred_check_branch
    %42 = sbr.rel (0) target = $region49
  $region48: #{ddpg_critic_forward.1} parent=0 // pred_region
    _
  $region49: #{ddpg_critic_forward.1} parent=0 // pred_fallthru
    _
  %v44 = vld [vmem:[%s0] sm:$0xf]
  %v45 = vld [vmem:[%s0 + $0x4] sm:$0xf]
  %v46 = vld [vmem:[%s1] sm:$0xf]
  %v47 = vld [vmem:[%s1 + $0x4] sm:$0xf]
  %v48 = vld [vmem:[%s1 + $0x8] sm:$0xf]
  %v49 = vld [vmem:[%s1 + $0xc] sm:$0xf]
  %v50 = vld [vmem:[%s1 + $0x10] sm:$0x7]
  %v51 = vld [vmem:[%s2] sm:$0x1]
  %v53 = vlaneseq
  %v54 = vshrl.u32 %v53, 7
  %v55 = vsub.s32 0, %v54
  %v56 = vrot.slane %v51, %v55
  %v60 = vunpack.c.l.b16 %v44
  %v61 = vunpack.c.l.b16 %v45
  %v62 = vpack.c.b16 %v61, %v60
  %v68 = vunpack.c.l.b16 %v46
  %v69 = vunpack.c.l.b16 %v47
  %v70 = vunpack.c.l.b16 %v48
  %v71 = vunpack.c.l.b16 %v49
  %v72 = vunpack.c.l.b16 %v50
  %v73 = vpack.c.b16 %v69, %v68
  %v74 = vpack.c.b16 %v71, %v70
  %v75 = vpack.c.b16 %v72, %v72
  %vm78 = vcmask 302080
  %v80 = vsel %vm78, %v62, 0
  %vm82 = vcmask 1041408
  %vm83 = vcmask 1042432
  %v84 = vsel %vm82, 4294967295, 65535
  %v85 = vsel %vm83, %v84, 0
  %v87 = vand.u32 %v75, %v85
  %89 = vmatprep.subr.bf16.mxu0 0
  %90 = vmatpush1.bf16.msra.mxu0 0
  %91 = vmatprep.subr.bf16.mxu0 0
  %92 = vmatpush1.bf16.msra.mxu0 0
  %93 = vmatprep.subr.bf16.mxu0 0
  %94 = vmatpush1.bf16.msra.mxu0 0
  %95 = vmatprep.subr.bf16.mxu0 0
  %96 = vmatpush1.bf16.msra.mxu0 0
  %97 = vmatprep.subr.bf16.mxu0 0
  %98 = vmatpush1.bf16.msra.mxu0 0
  %99 = vmatprep.subr.bf16.mxu0 0
  %100 = vmatpush1.bf16.msra.mxu0 %v87
  %101 = vmatprep.subr.bf16.mxu0 0
  %102 = vmatpush1.bf16.msra.mxu0 %v74
  %103 = vmatprep.subr.bf16.mxu0 0
  %104 = vmatpush1.bf16.msra.mxu0 %v73
  %105 = vmatprep.subr.bf16.mxu0 0
  %106 = vmatpush2.bf16.msra.mxu0 0
  %107 = vmatprep.subr.bf16.mxu0 0
  %108 = vmatpush2.bf16.msra.mxu0 0
  %109 = vmatprep.subr.bf16.mxu0 0
  %110 = vmatpush2.bf16.msra.mxu0 0
  %111 = vmatprep.subr.bf16.mxu0 0
  %112 = vmatpush2.bf16.msra.mxu0 0
  %113 = vmatprep.subr.bf16.mxu0 0
  %114 = vmatpush2.bf16.msra.mxu0 0
  %115 = vmatprep.subr.bf16.mxu0 0
  %116 = vmatpush2.bf16.msra.mxu0 0
  %117 = vmatprep.subr.bf16.mxu0 0
  %118 = vmatpush2.bf16.msra.mxu0 0
  %119 = vmatprep.subr.bf16.mxu0 0
  %120 = vmatpush2.bf16.msra.mxu0 0
  %121 = vmatprep.mubr.bf16.mxu0 0
  %122 = vmatmul.mubr.bf16.gmra.mxu0 %v80
  %v123 = vpop.f32.mrf.mxu0
  %v124 = vadd.f32 %v56, %v123
  %v125 = vpop.f32.mrf.mxu0
  %v126 = vpop.f32.mrf.mxu0
  %v127 = vadd.f32 %v56, %v126
  %v128 = vpop.f32.mrf.mxu0
  %129 = vdwg.mxu0
  %v130 = vmul.f32 %v124, 0.01
  %v131 = vmul.f32 %v127, 0.01
  %v132 = vmax.f32 %v124, %v130
  %v133 = vmax.f32 %v127, %v131
  %v134 = vpack.c.bf16 %v133, %v132
  %v135 = vld [vmem:[%s3] sm:$0xf]
  %v136 = vld [vmem:[%s3 + $0x4] sm:$0xf]
  %v137 = vld [vmem:[%s3 + $0x8] sm:$0xf]
  %v138 = vld [vmem:[%s3 + $0xc] sm:$0xf]
  %v139 = vld [vmem:[%s3 + $0x10] sm:$0xf]
  %v140 = vld [vmem:[%s3 + $0x14] sm:$0xf]
  %v141 = vld [vmem:[%s3 + $0x18] sm:$0xf]
  %v142 = vld [vmem:[%s3 + $0x1c] sm:$0xf]
  %v143 = vld [vmem:[%s3 + $0x20] sm:$0xf]
  %v144 = vld [vmem:[%s3 + $0x24] sm:$0xf]
  %v145 = vld [vmem:[%s3 + $0x28] sm:$0xf]
  %v146 = vld [vmem:[%s3 + $0x2c] sm:$0xf]
  %v147 = vld [vmem:[%s3 + $0x30] sm:$0xf]
  %v148 = vld [vmem:[%s3 + $0x34] sm:$0xf]
  %v149 = vld [vmem:[%s3 + $0x38] sm:$0xf]
  %v150 = vld [vmem:[%s3 + $0x3c] sm:$0xf]
  %v151 = vld [vmem:[%s4] sm:$0xf]
  %v152 = vld [vmem:[%s4 + $0x4] sm:$0xf]
  %v153 = vld [vmem:[%s4 + $0x8] sm:$0xf]
  %v154 = vld [vmem:[%s4 + $0xc] sm:$0xf]
  %v155 = vld [vmem:[%s4 + $0x10] sm:$0x7]
  %v161 = vunpack.c.l.b16 %v151
  %v162 = vunpack.c.l.b16 %v152
  %v163 = vunpack.c.l.b16 %v153
  %v164 = vunpack.c.l.b16 %v154
  %v165 = vunpack.c.l.b16 %v155
  %v166 = vpack.c.b16 %v162, %v161
  %v167 = vpack.c.b16 %v164, %v163
  %v168 = vpack.c.b16 %v165, %v165
  %v172 = vand.u32 %v168, %v85
  %174 = vmatprep.subr.bf16.mxu0 0
  %175 = vmatpush1.bf16.msra.mxu0 0
  %176 = vmatprep.subr.bf16.mxu0 0
  %177 = vmatpush1.bf16.msra.mxu0 0
  %178 = vmatprep.subr.bf16.mxu0 0
  %179 = vmatpush1.bf16.msra.mxu0 0
  %180 = vmatprep.subr.bf16.mxu0 0
  %181 = vmatpush1.bf16.msra.mxu0 0
  %182 = vmatprep.subr.bf16.mxu0 0
  %183 = vmatpush1.bf16.msra.mxu0 0
  %184 = vmatprep.subr.bf16.mxu0 0
  %185 = vmatpush1.bf16.msra.mxu0 %v172
  %186 = vmatprep.subr.bf16.mxu0 0
  %187 = vmatpush1.bf16.msra.mxu0 %v167
  %188 = vmatprep.subr.bf16.mxu0 0
  %189 = vmatpush1.bf16.msra.mxu0 %v166
  %190 = vmatprep.subr.bf16.mxu0 0
  %191 = vmatpush2.bf16.msra.mxu0 0
  %192 = vmatprep.subr.bf16.mxu0 0
  %193 = vmatpush2.bf16.msra.mxu0 0
  %194 = vmatprep.subr.bf16.mxu0 0
  %195 = vmatpush2.bf16.msra.mxu0 0
  %196 = vmatprep.subr.bf16.mxu0 0
  %197 = vmatpush2.bf16.msra.mxu0 0
  %198 = vmatprep.subr.bf16.mxu0 0
  %199 = vmatpush2.bf16.msra.mxu0 0
  %200 = vmatprep.subr.bf16.mxu0 0
  %201 = vmatpush2.bf16.msra.mxu0 0
  %202 = vmatprep.subr.bf16.mxu0 0
  %203 = vmatpush2.bf16.msra.mxu0 0
  %204 = vmatprep.subr.bf16.mxu0 0
  %205 = vmatpush2.bf16.msra.mxu0 0
  %206 = vmatprep.mubr.bf16.mxu0 0
  %207 = vmatmul.mubr.bf16.gmra.mxu0 %v80
  %v208 = vpop.f32.mrf.mxu0
  %v209 = vadd.f32 0.0, %v208
  %v210 = vpop.f32.mrf.mxu0
  %v211 = vpop.f32.mrf.mxu0
  %v212 = vadd.f32 0.0, %v211
  %v213 = vpop.f32.mrf.mxu0
  %214 = vdwg.mxu0
  %v231 = vunpack.c.l.b16 %v135
  %v232 = vunpack.c.l.b16 %v136
  %v233 = vunpack.c.l.b16 %v137
  %v234 = vunpack.c.l.b16 %v138
  %v235 = vunpack.c.l.b16 %v139
  %v236 = vunpack.c.l.b16 %v140
  %v237 = vunpack.c.l.b16 %v141
  %v238 = vunpack.c.l.b16 %v142
  %v239 = vunpack.c.l.b16 %v143
  %v240 = vunpack.c.l.b16 %v144
  %v241 = vunpack.c.l.b16 %v145
  %v242 = vunpack.c.l.b16 %v146
  %v243 = vunpack.c.l.b16 %v147
  %v244 = vunpack.c.l.b16 %v148
  %v245 = vunpack.c.l.b16 %v149
  %v246 = vunpack.c.l.b16 %v150
  %v247 = vpack.c.b16 %v232, %v231
  %v248 = vpack.c.b16 %v234, %v233
  %v249 = vpack.c.b16 %v236, %v235
  %v250 = vpack.c.b16 %v238, %v237
  %v251 = vpack.c.b16 %v240, %v239
  %v252 = vpack.c.b16 %v242, %v241
  %v253 = vpack.c.b16 %v244, %v243
  %v254 = vpack.c.b16 %v246, %v245
  %263 = vmatprep.subr.bf16.mxu0 0
  %264 = vmatpush1.bf16.msra.mxu0 %v254
  %265 = vmatprep.subr.bf16.mxu0 0
  %266 = vmatpush1.bf16.msra.mxu0 %v253
  %267 = vmatprep.subr.bf16.mxu0 0
  %268 = vmatpush1.bf16.msra.mxu0 %v252
  %269 = vmatprep.subr.bf16.mxu0 0
  %270 = vmatpush1.bf16.msra.mxu0 %v251
  %271 = vmatprep.subr.bf16.mxu0 0
  %272 = vmatpush1.bf16.msra.mxu0 %v250
  %273 = vmatprep.subr.bf16.mxu0 0
  %274 = vmatpush1.bf16.msra.mxu0 %v249
  %275 = vmatprep.subr.bf16.mxu0 0
  %276 = vmatpush1.bf16.msra.mxu0 %v248
  %277 = vmatprep.subr.bf16.mxu0 0
  %278 = vmatpush1.bf16.msra.mxu0 %v247
  %279 = vmatprep.subr.bf16.mxu0 0
  %280 = vmatpush2.bf16.msra.mxu0 0
  %281 = vmatprep.subr.bf16.mxu0 0
  %282 = vmatpush2.bf16.msra.mxu0 0
  %283 = vmatprep.subr.bf16.mxu0 0
  %284 = vmatpush2.bf16.msra.mxu0 0
  %285 = vmatprep.subr.bf16.mxu0 0
  %286 = vmatpush2.bf16.msra.mxu0 0
  %287 = vmatprep.subr.bf16.mxu0 0
  %288 = vmatpush2.bf16.msra.mxu0 0
  %289 = vmatprep.subr.bf16.mxu0 0
  %290 = vmatpush2.bf16.msra.mxu0 0
  %291 = vmatprep.subr.bf16.mxu0 0
  %292 = vmatpush2.bf16.msra.mxu0 0
  %293 = vmatprep.subr.bf16.mxu0 0
  %294 = vmatpush2.bf16.msra.mxu0 0
  %295 = vmatprep.mubr.bf16.mxu0 0
  %296 = vmatmul.mubr.bf16.gmra.mxu0 %v134
  %v297 = vpop.f32.mrf.mxu0
  %v298 = vadd.f32 %v209, %v297
  %v299 = vpop.f32.mrf.mxu0
  %v300 = vpop.f32.mrf.mxu0
  %v301 = vadd.f32 %v212, %v300
  %v302 = vpop.f32.mrf.mxu0
  %303 = vdwg.mxu0
  %v304 = vld [vmem:[%s5] sm:$0x1]
  %v306 = vlaneseq
  %v307 = vshrl.u32 %v306, 7
  %v308 = vsub.s32 0, %v307
  %v309 = vrot.slane %v304, %v308
  %v311 = vadd.f32 %v298, %v309
  %v312 = vadd.f32 %v301, %v309
  %v313 = vmul.f32 %v311, 0.01
  %v314 = vmul.f32 %v312, 0.01
  %v315 = vmax.f32 %v311, %v313
  %v316 = vmax.f32 %v312, %v314
  %v317 = vpack.c.bf16 %v316, %v315
  %v318 = vld [vmem:[%s6] sm:$0xf]
  %v319 = vld [vmem:[%s6 + $0x4] sm:$0xf]
  %v320 = vld [vmem:[%s6 + $0x8] sm:$0xf]
  %v321 = vld [vmem:[%s6 + $0xc] sm:$0xf]
  %v322 = vld [vmem:[%s6 + $0x10] sm:$0xf]
  %v323 = vld [vmem:[%s6 + $0x14] sm:$0xf]
  %v324 = vld [vmem:[%s6 + $0x18] sm:$0xf]
  %v325 = vld [vmem:[%s6 + $0x1c] sm:$0xf]
  %v326 = vld [vmem:[%s6 + $0x20] sm:$0xf]
  %v327 = vld [vmem:[%s6 + $0x24] sm:$0xf]
  %v328 = vld [vmem:[%s6 + $0x28] sm:$0xf]
  %v329 = vld [vmem:[%s6 + $0x2c] sm:$0xf]
  %v330 = vld [vmem:[%s6 + $0x30] sm:$0xf]
  %v331 = vld [vmem:[%s6 + $0x34] sm:$0xf]
  %v332 = vld [vmem:[%s6 + $0x38] sm:$0xf]
  %v333 = vld [vmem:[%s6 + $0x3c] sm:$0xf]
  %v334 = vld [vmem:[%s7] sm:$0x1]
  %v336 = vlaneseq
  %v337 = vshrl.u32 %v336, 7
  %v338 = vsub.s32 0, %v337
  %v339 = vrot.slane %v334, %v338
  %v357 = vunpack.c.l.b16 %v318
  %v358 = vunpack.c.l.b16 %v319
  %v359 = vunpack.c.l.b16 %v320
  %v360 = vunpack.c.l.b16 %v321
  %v361 = vunpack.c.l.b16 %v322
  %v362 = vunpack.c.l.b16 %v323
  %v363 = vunpack.c.l.b16 %v324
  %v364 = vunpack.c.l.b16 %v325
  %v365 = vunpack.c.l.b16 %v326
  %v366 = vunpack.c.l.b16 %v327
  %v367 = vunpack.c.l.b16 %v328
  %v368 = vunpack.c.l.b16 %v329
  %v369 = vunpack.c.l.b16 %v330
  %v370 = vunpack.c.l.b16 %v331
  %v371 = vunpack.c.l.b16 %v332
  %v372 = vunpack.c.l.b16 %v333
  %v373 = vpack.c.b16 %v358, %v357
  %v374 = vpack.c.b16 %v360, %v359
  %v375 = vpack.c.b16 %v362, %v361
  %v376 = vpack.c.b16 %v364, %v363
  %v377 = vpack.c.b16 %v366, %v365
  %v378 = vpack.c.b16 %v368, %v367
  %v379 = vpack.c.b16 %v370, %v369
  %v380 = vpack.c.b16 %v372, %v371
  %389 = vmatprep.subr.bf16.mxu0 0
  %390 = vmatpush1.bf16.msra.mxu0 %v380
  %391 = vmatprep.subr.bf16.mxu0 0
  %392 = vmatpush1.bf16.msra.mxu0 %v379
  %393 = vmatprep.subr.bf16.mxu0 0
  %394 = vmatpush1.bf16.msra.mxu0 %v378
  %395 = vmatprep.subr.bf16.mxu0 0
  %396 = vmatpush1.bf16.msra.mxu0 %v377
  %397 = vmatprep.subr.bf16.mxu0 0
  %398 = vmatpush1.bf16.msra.mxu0 %v376
  %399 = vmatprep.subr.bf16.mxu0 0
  %400 = vmatpush1.bf16.msra.mxu0 %v375
  %401 = vmatprep.subr.bf16.mxu0 0
  %402 = vmatpush1.bf16.msra.mxu0 %v374
  %403 = vmatprep.subr.bf16.mxu0 0
  %404 = vmatpush1.bf16.msra.mxu0 %v373
  %405 = vmatprep.subr.bf16.mxu0 0
  %406 = vmatpush2.bf16.msra.mxu0 0
  %407 = vmatprep.subr.bf16.mxu0 0
  %408 = vmatpush2.bf16.msra.mxu0 0
  %409 = vmatprep.subr.bf16.mxu0 0
  %410 = vmatpush2.bf16.msra.mxu0 0
  %411 = vmatprep.subr.bf16.mxu0 0
  %412 = vmatpush2.bf16.msra.mxu0 0
  %413 = vmatprep.subr.bf16.mxu0 0
  %414 = vmatpush2.bf16.msra.mxu0 0
  %415 = vmatprep.subr.bf16.mxu0 0
  %416 = vmatpush2.bf16.msra.mxu0 0
  %417 = vmatprep.subr.bf16.mxu0 0
  %418 = vmatpush2.bf16.msra.mxu0 0
  %419 = vmatprep.subr.bf16.mxu0 0
  %420 = vmatpush2.bf16.msra.mxu0 0
  %421 = vmatprep.mubr.bf16.mxu0 0
  %422 = vmatmul.mubr.bf16.gmra.mxu0 %v317
  %v423 = vpop.f32.mrf.mxu0
  %v424 = vadd.f32 %v339, %v423
  %v425 = vpop.f32.mrf.mxu0
  %v426 = vpop.f32.mrf.mxu0
  %v427 = vadd.f32 %v339, %v426
  %v428 = vpop.f32.mrf.mxu0
  %429 = vdwg.mxu0
  %v430 = vmul.f32 %v424, 0.01
  %v431 = vmul.f32 %v427, 0.01
  %v432 = vmax.f32 %v424, %v430
  %v433 = vmax.f32 %v427, %v431
  %v434 = vpack.c.bf16 %v433, %v432
  %v435 = vld [vmem:[%s8] sm:$0xf]
  %v436 = vld [vmem:[%s8 + $0x4] sm:$0xf]
  %v437 = vld [vmem:[%s8 + $0x8] sm:$0xf]
  %v438 = vld [vmem:[%s8 + $0xc] sm:$0xf]
  %v439 = vld [vmem:[%s8 + $0x10] sm:$0xf]
  %v440 = vld [vmem:[%s8 + $0x14] sm:$0xf]
  %v441 = vld [vmem:[%s8 + $0x18] sm:$0xf]
  %v442 = vld [vmem:[%s8 + $0x1c] sm:$0xf]
  %v443 = vld [vmem:[%s9] sm:$0x1]
  %v445 = vlaneseq
  %v446 = vshrl.u32 %v445, 7
  %v447 = vsub.s32 0, %v446
  %v448 = vrot.slane %v443, %v447
  %v458 = vunpack.c.l.b16 %v435
  %v459 = vunpack.c.l.b16 %v436
  %v460 = vunpack.c.l.b16 %v437
  %v461 = vunpack.c.l.b16 %v438
  %v462 = vunpack.c.l.b16 %v439
  %v463 = vunpack.c.l.b16 %v440
  %v464 = vunpack.c.l.b16 %v441
  %v465 = vunpack.c.l.b16 %v442
  %v466 = vpack.c.b16 %v459, %v458
  %v467 = vpack.c.b16 %v461, %v460
  %v468 = vpack.c.b16 %v463, %v462
  %v469 = vpack.c.b16 %v465, %v464
  %vm474 = vcmask 523264
  %v476 = vsel %vm474, %v434, 0
  %478 = vmatprep.subr.bf16.mxu0 0
  %479 = vmatpush1.bf16.msra.mxu0 0
  %480 = vmatprep.subr.bf16.mxu0 0
  %481 = vmatpush1.bf16.msra.mxu0 0
  %482 = vmatprep.subr.bf16.mxu0 0
  %483 = vmatpush1.bf16.msra.mxu0 0
  %484 = vmatprep.subr.bf16.mxu0 0
  %485 = vmatpush1.bf16.msra.mxu0 0
  %486 = vmatprep.subr.bf16.mxu0 0
  %487 = vmatpush1.bf16.msra.mxu0 %v469
  %488 = vmatprep.subr.bf16.mxu0 0
  %489 = vmatpush1.bf16.msra.mxu0 %v468
  %490 = vmatprep.subr.bf16.mxu0 0
  %491 = vmatpush1.bf16.msra.mxu0 %v467
  %492 = vmatprep.subr.bf16.mxu0 0
  %493 = vmatpush1.bf16.msra.mxu0 %v466
  %494 = vmatprep.subr.bf16.mxu0 0
  %495 = vmatpush2.bf16.msra.mxu0 0
  %496 = vmatprep.subr.bf16.mxu0 0
  %497 = vmatpush2.bf16.msra.mxu0 0
  %498 = vmatprep.subr.bf16.mxu0 0
  %499 = vmatpush2.bf16.msra.mxu0 0
  %500 = vmatprep.subr.bf16.mxu0 0
  %501 = vmatpush2.bf16.msra.mxu0 0
  %502 = vmatprep.subr.bf16.mxu0 0
  %503 = vmatpush2.bf16.msra.mxu0 0
  %504 = vmatprep.subr.bf16.mxu0 0
  %505 = vmatpush2.bf16.msra.mxu0 0
  %506 = vmatprep.subr.bf16.mxu0 0
  %507 = vmatpush2.bf16.msra.mxu0 0
  %508 = vmatprep.subr.bf16.mxu0 0
  %509 = vmatpush2.bf16.msra.mxu0 0
  %510 = vmatprep.mubr.bf16.mxu0 0
  %511 = vmatmul.mubr.bf16.gmra.mxu0 %v476
  %v512 = vpop.f32.mrf.mxu0
  %v513 = vadd.f32 %v448, %v512
  %v514 = vpop.f32.mrf.mxu0
  %v515 = vpop.f32.mrf.mxu0
  %v516 = vadd.f32 %v448, %v515
  %v517 = vpop.f32.mrf.mxu0
  %518 = vdwg.mxu0
  %v519 = vmul.f32 %v513, 0.01
  %v520 = vmul.f32 %v516, 0.01
  %v521 = vmax.f32 %v513, %v519
  %v522 = vmax.f32 %v516, %v520
  %v523 = vpack.c.bf16 %v522, %v521
  %v524 = vld [vmem:[%s10] sm:$0xf]
  %v525 = vld [vmem:[%s10 + $0x4] sm:$0xf]
  %v526 = vld [vmem:[%s10 + $0x8] sm:$0xf]
  %v527 = vld [vmem:[%s10 + $0xc] sm:$0xf]
  %v528 = vld [vmem:[%s10 + $0x10] sm:$0xf]
  %v529 = vld [vmem:[%s10 + $0x14] sm:$0xf]
  %v530 = vld [vmem:[%s10 + $0x18] sm:$0xf]
  %v531 = vld [vmem:[%s10 + $0x1c] sm:$0xf]
  %v532 = vld [vmem:[#allocation2] sm:$0x1]
  %v534 = vlaneseq
  %v535 = vshrl.u32 %v534, 7
  %v536 = vsub.s32 0, %v535
  %v537 = vrot.slane %v532, %v536
  %v547 = vunpack.c.l.b16 %v524
  %v548 = vunpack.c.l.b16 %v525
  %v549 = vunpack.c.l.b16 %v526
  %v550 = vunpack.c.l.b16 %v527
  %v551 = vunpack.c.l.b16 %v528
  %v552 = vunpack.c.l.b16 %v529
  %v553 = vunpack.c.l.b16 %v530
  %v554 = vunpack.c.l.b16 %v531
  %v555 = vpack.c.b16 %v548, %v547
  %v556 = vpack.c.b16 %v550, %v549
  %v557 = vpack.c.b16 %v552, %v551
  %v558 = vpack.c.b16 %v554, %v553
  %v564 = vsel %vm474, %v523, 0
  %566 = vmatprep.subr.bf16.mxu0 0
  %567 = vmatpush1.bf16.msra.mxu0 0
  %568 = vmatprep.subr.bf16.mxu0 0
  %569 = vmatpush1.bf16.msra.mxu0 0
  %570 = vmatprep.subr.bf16.mxu0 0
  %571 = vmatpush1.bf16.msra.mxu0 0
  %572 = vmatprep.subr.bf16.mxu0 0
  %573 = vmatpush1.bf16.msra.mxu0 0
  %574 = vmatprep.subr.bf16.mxu0 0
  %575 = vmatpush1.bf16.msra.mxu0 %v558
  %576 = vmatprep.subr.bf16.mxu0 0
  %577 = vmatpush1.bf16.msra.mxu0 %v557
  %578 = vmatprep.subr.bf16.mxu0 0
  %579 = vmatpush1.bf16.msra.mxu0 %v556
  %580 = vmatprep.subr.bf16.mxu0 0
  %581 = vmatpush1.bf16.msra.mxu0 %v555
  %582 = vmatprep.subr.bf16.mxu0 0
  %583 = vmatpush2.bf16.msra.mxu0 0
  %584 = vmatprep.subr.bf16.mxu0 0
  %585 = vmatpush2.bf16.msra.mxu0 0
  %586 = vmatprep.subr.bf16.mxu0 0
  %587 = vmatpush2.bf16.msra.mxu0 0
  %588 = vmatprep.subr.bf16.mxu0 0
  %589 = vmatpush2.bf16.msra.mxu0 0
  %590 = vmatprep.subr.bf16.mxu0 0
  %591 = vmatpush2.bf16.msra.mxu0 0
  %592 = vmatprep.subr.bf16.mxu0 0
  %593 = vmatpush2.bf16.msra.mxu0 0
  %594 = vmatprep.subr.bf16.mxu0 0
  %595 = vmatpush2.bf16.msra.mxu0 0
  %596 = vmatprep.subr.bf16.mxu0 0
  %597 = vmatpush2.bf16.msra.mxu0 0
  %598 = vmatprep.mubr.bf16.mxu0 0
  %599 = vmatmul.mubr.bf16.gmra.mxu0 %v564
  %v600 = vpop.f32.mrf.mxu0
  %v601 = vadd.f32 %v537, %v600
  %v602 = vpop.f32.mrf.mxu0
  %v603 = vpop.f32.mrf.mxu0
  %v604 = vadd.f32 %v537, %v603
  %v605 = vpop.f32.mrf.mxu0
  %606 = vdwg.mxu0
  %vm607 = vcmask 7168
  %608 = vst.msk [vmem:[%s12] sm:$0xff] %vm607, %v601
  %609 = vst.msk [vmem:[%s12 + $0x8] sm:$0xff] %vm607, %v604
  // Predicated region
  $region50: #{ddpg_critic_forward.1} parent=0 // pred_check
    _
  $region51: #{ddpg_critic_forward.1} parent=0 // pred_check_branch
    %611 = sbr.rel (0) target = $region53
  $region52: #{ddpg_critic_forward.1} parent=0 // pred_region
    _
  $region53: #{ddpg_critic_forward.1} parent=0 // pred_fallthru
    _
  // Predicated region
  $region54: #{ddpg_critic_forward.1} parent=0 // pred_check
    _
  $region55: #{ddpg_critic_forward.1} parent=0 // pred_check_branch
    %613 = sbr.rel (0) target = $region57
  $region56: #{ddpg_critic_forward.1} parent=0 // pred_region
    _
  $region57: #{ddpg_critic_forward.1} parent=0 // pred_fallthru
    _

</llo_original>
